<compile_context>
chip_gen: v7x
topology: tpu7x:2x2x1
jax: 0.10.0
libtpu: 0.0.40
codegen_flags: <defaults>
</compile_context>

<pallas_src>
import jax
import jax.numpy as jnp
from jax.experimental import pallas as pl
from jax.experimental.pallas import tpu as pltpu


def _mish_kernel(x_ref, o_ref):
    x = x_ref[...]
    xf = x.astype(jnp.float32)
    # PyTorch softplus (beta=1, threshold=20): x for x > 20, log1p(exp(x)) else.
    sp = jnp.where(xf > 20.0, xf, jnp.log1p(jnp.exp(jnp.minimum(xf, 20.0))))
    y = xf * jnp.tanh(sp)
    o_ref[...] = y.astype(o_ref.dtype)


def mish(x, *, target_block_bytes=2 * 1024 * 1024):
    """Mish activation (elementwise). Accepts any shape / float dtype."""
    orig_shape = x.shape
    orig_dtype = x.dtype
    n = x.size
    if n == 0:
        return x

    lanes = 128
    itemsize = jnp.dtype(orig_dtype).itemsize
    # ~target_block_bytes per block (1-4 MiB sweet spot), multiple of 8 rows.
    block_rows = max(8, (target_block_bytes // (lanes * itemsize)) // 8 * 8)

    # Pad flat length only to the minimal (8 * 128)-aligned size. Block
    # raggedness (rows % tr != 0) is handled by the cdiv grid with Pallas
    # edge masking, so we never pad to a full block multiple.
    rows = pl.cdiv(n, lanes * 8) * 8
    padded = rows * lanes

    x_flat = x.reshape(-1)
    if padded != n:
        x_flat = jnp.pad(x_flat, (0, padded - n))  # dtype preserved
    x2d = x_flat.reshape(rows, lanes)

    tr = min(block_rows, rows)          # bounded block size, never whole array
    grid = (pl.cdiv(rows, tr),)

    out2d = pl.pallas_call(
        _mish_kernel,
        out_shape=jax.ShapeDtypeStruct((rows, lanes), orig_dtype),
        grid_spec=pltpu.PrefetchScalarGridSpec(
            num_scalar_prefetch=0,
            grid=grid,
            in_specs=[pl.BlockSpec((tr, lanes), lambda i: (i, 0))],
            out_specs=pl.BlockSpec((tr, lanes), lambda i: (i, 0)),
        ),
        compiler_params=pltpu.CompilerParams(
            dimension_semantics=("parallel",),
        ),
    )(x2d)

    out_flat = out2d.reshape(-1)
    if padded != n:
        out_flat = out_flat[:n]
    return out_flat.reshape(orig_shape)


def _mish_ref(x):
    # Exact reference mirroring PyTorch: x * tanh(softplus(x)), threshold=20.
    xf = x.astype(jnp.float32)
    sp = jnp.where(xf > 20.0, xf, jnp.log1p(jnp.exp(jnp.minimum(xf, 20.0))))
    return (xf * jnp.tanh(sp)).astype(x.dtype)


if __name__ == "__main__":
    key = jax.random.PRNGKey(0)

    # Primary test: NCHW input, consistent with PyTorch conv-style activations.
    x = jax.random.normal(key, (2, 4, 16, 16), dtype=jnp.float32) * 3.0
    y = jax.block_until_ready(mish(x))
    y_ref = _mish_ref(x)
    assert y.shape == x.shape and y.dtype == x.dtype
    assert jnp.allclose(y, y_ref, atol=1e-3, rtol=1e-3)

    # bf16 path: I/O stays bf16 (half the HBM traffic), compute in f32.
    xb = x.astype(jnp.bfloat16)
    yb = jax.block_until_ready(mish(xb))
    assert yb.dtype == jnp.bfloat16
    assert jnp.allclose(yb.astype(jnp.float32), _mish_ref(xb).astype(jnp.float32),
                        atol=2e-2, rtol=2e-2)

    # Unaligned size: exercises the minimal-pad path and the masked ragged
    # edge block (rows not a multiple of tr -> cdiv grid with an edge block).
    key2 = jax.random.PRNGKey(1)
    xu = jax.random.normal(key2, (3, 5, 17, 23), dtype=jnp.float32) * 3.0
    yu = jax.block_until_ready(mish(xu, target_block_bytes=16 * 1024))
    assert yu.shape == xu.shape
    assert jnp.allclose(yu, _mish_ref(xu), atol=1e-3, rtol=1e-3)

    print("KERNEL_OK")
</pallas_src>

<mosaic_0001>
module attributes {stable_mosaic.version = 11 : i64} {
  func.func @_mish_kernel(%arg0: i32, %arg1: memref<16x128xf32, #tpu.memory_space<vmem>>, %arg2: memref<16x128xf32, #tpu.memory_space<vmem>>) attributes {dimension_semantics = [#tpu.dimension_semantics<parallel>], iteration_bounds = array<i64: 1>, scalar_prefetch = 0 : i64, scratch_operands = 0 : i64, tpu.core_type = #tpu.core_type<tc>, window_params = [{transform_indices = @transform_0, window_bounds = array<i64: 16, 128>}, {transform_indices = @transform_1, window_bounds = array<i64: 16, 128>}]} {
    %c0 = arith.constant 0 : index
    %c0_0 = arith.constant 0 : index
    %0 = vector.load %arg1[%c0, %c0_0] : memref<16x128xf32, #tpu.memory_space<vmem>>, vector<16x128xf32>
    %cst = arith.constant 2.000000e+01 : f32
    %1 = vector.broadcast %cst : f32 to vector<16x128xf32>
    %2 = arith.cmpf ogt, %0, %1 : vector<16x128xf32>
    %cst_1 = arith.constant 2.000000e+01 : f32
    %3 = vector.broadcast %cst_1 : f32 to vector<16x128xf32>
    %4 = arith.minimumf %0, %3 : vector<16x128xf32>
    %5 = math.exp %4 : vector<16x128xf32>
    %6 = math.log1p %5 : vector<16x128xf32>
    %7 = arith.select %2, %0, %6 : vector<16x128xi1>, vector<16x128xf32>
    %8 = math.tanh %7 : vector<16x128xf32>
    %9 = arith.mulf %0, %8 : vector<16x128xf32>
    %c0_2 = arith.constant 0 : index
    %c0_3 = arith.constant 0 : index
    %10 = vector.load %arg2[%c0_2, %c0_3] : memref<16x128xf32, #tpu.memory_space<vmem>>, vector<16x128xf32>
    tpu.vector_store %arg2[%c0_2, %c0_3], %9 {strides = array<i32>} : memref<16x128xf32, #tpu.memory_space<vmem>>, vector<16x128xf32>,
    return
  }
  func.func @transform_0(%arg0: i32) -> (i32, i32) {
    %c0_i32 = arith.constant 0 : i32
    %c0_i32_0 = arith.constant 0 : i32
    return %arg0, %c0_i32 : i32, i32
  }
  func.func @transform_1(%arg0: i32) -> (i32, i32) {
    %c0_i32 = arith.constant 0 : i32
    %c0_i32_0 = arith.constant 0 : i32
    return %arg0, %c0_i32 : i32, i32
  }
}

</mosaic_0001>

<llo_original>
// kernel: tpu_custom_call.1
$region0: #{tpu_custom_call.1}
  #allocation0 [shape = 'u32[]', space=smem, size = 0x4, offset = 0x4, fixed_abs, tag = 'smem constant byte address 0x4 - core index']
  #allocation1 [shape = 'u32[144,128]{1,0:T(1,128)}', space=vmem, size = 0x12000, scoped, tag = 'internal scratch']
  %s0 = inlined_call_operand.hbm [shape: f32[16,128], index: 0, kind: input, shape index: {}]
  %s1 = inlined_call_operand.hbm [shape: f32[16,128], index: 1, kind: output, shape index: {}]
  %s2 = sld [smem:[#allocation0]]
  $region18: #{tpu_custom_call.1} parent=0
    _
  %s4 = ssub.s32 1, %s2
  %s5 = scalar_select 0, %s4, %s2
  $region1: #{tpu_custom_call.1} parent=0
    #allocation2 [shape = 'u8[8192]{0}', space=vmem, size = 0x2000, scoped, tag = 'input window, operand 0, single buffered']
    #allocation3 [shape = 's32[1]{0}', space=sflag, size = 0x4, scoped, tag = 'scoped memory for tpu_custom_call.1']
    #allocation4 [shape = 's32[1]{0}', space=sflag, size = 0x4, scoped, tag = 'scoped memory for tpu_custom_call.1']
    #allocation5 [shape = 'u8[8192]{0}', space=vmem, size = 0x2000, scoped, tag = 'output window, operand 0, single buffered']
    %6 = vsyncpa [#allocation3], 0
    %7 = vsyncpa [#allocation4], 0
    // Predicated region
    $region2: #{tpu_custom_call.1} parent=1 // pred_check
      _
    $region3: #{tpu_custom_call.1} parent=1 // pred_check_branch
      %9 = sbr.rel (0) target = $region5
    $region4: #{tpu_custom_call.1} parent=1 // pred_region
      %s11 = ssub.s32 256, 256
      %12 = vsyncadd [#allocation3], %s11
      %s13 = sshll.u32 [#allocation2], 4
      %s14 = int_to_ptr.vmem [resolvable:$true] %s13
      %19 = dma.hbm_to_vmem [thread:$0]  %s0, 256, %s14, [#allocation3], 128, 128, 8
    $region5: #{tpu_custom_call.1} parent=1 // pred_fallthru
      _
    // Predicated region
    $region6: #{tpu_custom_call.1} parent=1 // pred_check
      _
    $region7: #{tpu_custom_call.1} parent=1 // pred_check_branch
      %21 = sbr.rel (0) target = $region9
    $region8: #{tpu_custom_call.1} parent=1 // pred_region
      %22 = dma.done [#allocation3], 256
    $region9: #{tpu_custom_call.1} parent=1 // pred_fallthru
      _
    %v23 = vld [vmem:[#allocation2] sm:$0xff]
    %v24 = vld [vmem:[#allocation2 + $0x8] sm:$0xff]
    %vm25 = vcmp.gt.f32.partialorder %v23, 20.0
    %vm26 = vcmp.gt.f32.partialorder %v24, 20.0
    %v27 = vmin.f32 %v23, 20.0
    %v28 = vmin.f32 %v24, 20.0
    %v29 = vmul.f32 %v27, 1.442695
    %v30 = vpow.pop %v29
    %v31 = vmul.f32 %v28, 1.442695
    %v32 = vpow.pop %v31
    %v33 = vadd.f32 %v30, 1.0
    %v34 = vlog2.pop %v33
    %v35 = vmul.f32 %v34, 0.6931472
    %v36 = vmul.f32 -0.5, %v30
    %v37 = vadd.f32 %v36, 1.0
    %v38 = vmul.f32 %v37, %v30
    %v39 = vand.u32 2147483647, %v30
    %vm40 = vcmp.lt.f32.partialorder %v39, 0.0004427343
    %v41 = vsel %vm40, %v38, %v35
    %v42 = vadd.f32 %v32, 1.0
    %v43 = vlog2.pop %v42
    %v44 = vmul.f32 %v43, 0.6931472
    %v45 = vmul.f32 -0.5, %v32
    %v46 = vadd.f32 %v45, 1.0
    %v47 = vmul.f32 %v46, %v32
    %v48 = vand.u32 2147483647, %v32
    %vm49 = vcmp.lt.f32.partialorder %v48, 0.0004427343
    %v50 = vsel %vm49, %v47, %v44
    %v51 = vsel %vm25, %v23, %v41
    %v52 = vsel %vm26, %v24, %v50
    %v53 = vtanh.pop %v51
    %v54 = vtanh.pop %v52
    %v55 = vmul.f32 %v23, %v53
    %v56 = vmul.f32 %v24, %v54
    %57 = vst [vmem:[#allocation5] sm:$0xff] %v55
    %58 = vst [vmem:[#allocation5 + $0x8] sm:$0xff] %v56
    // Predicated region
    $region10: #{tpu_custom_call.1} parent=1 // pred_check
      _
    $region11: #{tpu_custom_call.1} parent=1 // pred_check_branch
      %60 = sbr.rel (0) target = $region13
    $region12: #{tpu_custom_call.1} parent=1 // pred_region
      %s62 = ssub.s32 256, 256
      %63 = vsyncadd [#allocation4], %s62
      %s64 = sshll.u32 [#allocation5], 4
      %s65 = int_to_ptr.vmem [resolvable:$true] %s64
      %70 = dma.vmem_to_hbm [thread:$0]  %s65, 256, %s1, [#allocation4], 128, 128, 8
    $region13: #{tpu_custom_call.1} parent=1 // pred_fallthru
      _
    // Predicated region
    $region14: #{tpu_custom_call.1} parent=1 // pred_check
      _
    $region15: #{tpu_custom_call.1} parent=1 // pred_check_branch
      %72 = sbr.rel (0) target = $region17
    $region16: #{tpu_custom_call.1} parent=1 // pred_region
      %73 = dma.done [#allocation4], 256
    $region17: #{tpu_custom_call.1} parent=1 // pred_fallthru
      _
    %74 = vsyncpa [#allocation3], 1
    %75 = vsyncpa [#allocation4], 1

</llo_original>
